<compile_context>
chip_gen: v5e
topology: v5e:2x2
jax: 0.10.0
libtpu: 0.0.40
codegen_flags: <defaults>
</compile_context>

<pallas_src>
import functools

import jax
import jax.numpy as jnp
from jax.experimental import pallas as pl
from jax.experimental.pallas import tpu as pltpu


LANE = 128  # TPU lane width; the FC-head output is padded to this.


# ----------------------------- fused kernel -----------------------------

def _seq2seq_kernel(src_ref, enc_wih_ref, enc_whh_ref, enc_b_ref,
                    dec_wih_ref, dec_whh_ref, dec_b_ref,
                    dec_wrec_ref, dec_brec_ref, fc_w_ref, fc_b_ref,
                    out_ref, *, batch, hidden_dim, target_seq_len):
    B, H, S = batch, hidden_dim, target_seq_len
    TB = src_ref.shape[0]
    T = TB // B

    def cell(gates, c):
        # Two full-vreg EUP passes on the whole (B, 4H) gates; slice afterwards.
        sig = jax.nn.sigmoid(gates)
        th = jnp.tanh(gates)
        i_g = sig[:, 0 * H:1 * H]
        f_g = sig[:, 1 * H:2 * H]
        o_g = sig[:, 3 * H:4 * H]
        g_g = th[:, 2 * H:3 * H]
        c_new = f_g * c + i_g * g_g
        h_new = o_g * jnp.tanh(c_new)
        return h_new, c_new

    # ---- encoder input projection: ONE matmul for all T steps, bias folded
    #      in once.  src rows are (t, b)-ordered, so step t is rows t*B:(t+1)*B.
    xp = (jnp.dot(src_ref[...], enc_wih_ref[...],
                  preferred_element_type=jnp.float32)
          + enc_b_ref[...])                                   # (T*B, 4H)
    enc_whh = enc_whh_ref[...]                                # hoisted (H, 4H)

    h = jnp.zeros((B, H), jnp.float32)
    c = jnp.zeros((B, H), jnp.float32)

    # T, S are small here; static unrolling is fine.  For long sequences,
    # switch to lax.fori_loop(..., unroll=True) with (h, c) as carry.
    for t in range(T):
        gates = xp[t * B:(t + 1) * B, :] + jnp.dot(
            h, enc_whh, preferred_element_type=jnp.float32)   # 32-row RHS push
        h, c = cell(gates, c)

    # ---- decoder step 0: input is the last source step.  Source features
    #      beyond output_dim hit zero rows of dec_wih (padded in wrapper).
    x_last = src_ref[(T - 1) * B:T * B, :]                    # (B, D)
    gates = (jnp.dot(x_last, dec_wih_ref[...],
                     preferred_element_type=jnp.float32)
             + jnp.dot(h, dec_whh_ref[...],
                       preferred_element_type=jnp.float32)
             + dec_b_ref[...])
    h, c = cell(gates, c)

    # Hoisted invariants for the decoder loop (loaded / broadcast once).
    fc_w = fc_w_ref[...]                                      # (H, LANE)
    fc_b = jnp.broadcast_to(fc_b_ref[...], (B, LANE))
    dec_wrec = dec_wrec_ref[...]                              # (H, 4H)
    dec_brec = jnp.broadcast_to(dec_brec_ref[...], (B, 4 * H))

    # FC head for step 0; lane-aligned 128-wide store (no final concat).
    pred = jnp.dot(h, fc_w, preferred_element_type=jnp.float32) + fc_b
    out_ref[:, 0:LANE] = pred

    # ---- decoder steps 1..S-1: prediction feedback is folded into dec_wrec,
    #      so the serial chain per step is one (H, 4H) matmul; the FC head is
    #      off the chain and its result is stored immediately.
    for s in range(1, S):
        gates = jnp.dot(h, dec_wrec,
                        preferred_element_type=jnp.float32) + dec_brec
        h, c = cell(gates, c)
        pred = jnp.dot(h, fc_w, preferred_element_type=jnp.float32) + fc_b
        out_ref[:, s * LANE:(s + 1) * LANE] = pred


# ----------------------------- wrapper -----------------------------

@functools.partial(jax.jit,
                   static_argnames=("target_seq_len", "hidden_dim", "output_dim"))
def seq2seq_forward(params, source, *, target_seq_len, hidden_dim, output_dim):
    """source: (B, T, D) batch_first, like PyTorch. Returns (B, S, O). D >= O."""
    B, T, D = source.shape
    H, O, S, P = hidden_dim, output_dim, target_seq_len, LANE
    f32 = jnp.float32

    # Layout / weight prep (plain XLA, outside the kernel):
    #  * (t, b)-major 2-D source so the in-kernel encoder projection is one
    #    matmul and each step's rows are contiguous,
    #  * zero-pad dec W_ih rows O..D so the kernel can feed the raw last source
    #    step without masking,
    #  * fold the FC head into the decoder recurrent weight for steps >= 1,
    #  * pad the FC head to 128 output lanes (lane-dense kernel output).
    src2d = jnp.transpose(source.astype(f32), (1, 0, 2)).reshape(T * B, D)

    enc_wih = params["enc_wih_t"].astype(f32)                 # (D, 4H)
    enc_whh = params["enc_whh_t"].astype(f32)                 # (H, 4H)
    enc_b = params["enc_b"].astype(f32)                       # (1, 4H)
    dec_wih = params["dec_wih_t"].astype(f32)                 # (O, 4H)
    dec_whh = params["dec_whh_t"].astype(f32)                 # (H, 4H)
    dec_b = params["dec_b"].astype(f32)                       # (1, 4H)
    fc_w = params["fc_w"].astype(f32)                         # (H, O)
    fc_b = params["fc_b"].astype(f32)                         # (1, O)

    dec_wih_p = jnp.pad(dec_wih, ((0, D - O), (0, 0)))        # (D, 4H)
    dec_wrec = fc_w @ dec_wih + dec_whh                       # (H, 4H)
    dec_brec = fc_b @ dec_wih + dec_b                         # (1, 4H)
    fc_w_pad = jnp.pad(fc_w, ((0, 0), (0, P - O)))            # (H, P)
    fc_b_pad = jnp.pad(fc_b, ((0, 0), (0, P - O)))            # (1, P)

    vmem = pl.BlockSpec(memory_space=pltpu.MemorySpace.VMEM)
    out_pad = pl.pallas_call(
        functools.partial(_seq2seq_kernel, batch=B, hidden_dim=H,
                          target_seq_len=S),
        out_shape=jax.ShapeDtypeStruct((B, S * P), f32),
        in_specs=[vmem] * 11,
        out_specs=vmem,
    )(src2d, enc_wih, enc_whh, enc_b, dec_wih_p, dec_whh, dec_b,
      dec_wrec, dec_brec, fc_w_pad, fc_b_pad)

    return out_pad.reshape(B, S, P)[:, :, :O]                 # (B, S, O)


# ----------------------------- pure-JAX reference -----------------------------

def _lstm_cell_ref(x, h, c, wih_t, whh_t, b, H):
    gates = x @ wih_t + h @ whh_t + b
    i = jax.nn.sigmoid(gates[:, 0 * H:1 * H])
    f = jax.nn.sigmoid(gates[:, 1 * H:2 * H])
    g = jnp.tanh(gates[:, 2 * H:3 * H])
    o = jax.nn.sigmoid(gates[:, 3 * H:4 * H])
    c_new = f * c + i * g
    h_new = o * jnp.tanh(c_new)
    return h_new, c_new


def seq2seq_ref(params, source, target_seq_len, hidden_dim, output_dim):
    B, T, D = source.shape
    H = hidden_dim
    h = jnp.zeros((B, H), jnp.float32)
    c = jnp.zeros((B, H), jnp.float32)
    for t in range(T):
        h, c = _lstm_cell_ref(source[:, t, :], h, c,
                              params["enc_wih_t"], params["enc_whh_t"],
                              params["enc_b"], H)
    dec_in = source[:, -1, :output_dim]
    outs = []
    for _ in range(target_seq_len):
        h, c = _lstm_cell_ref(dec_in, h, c,
                              params["dec_wih_t"], params["dec_whh_t"],
                              params["dec_b"], H)
        pred = h @ params["fc_w"] + params["fc_b"]
        outs.append(pred)
        dec_in = pred
    return jnp.stack(outs, axis=1)


# ----------------------------- main -----------------------------

if __name__ == "__main__":
    B, T, D = 2, 8, 8          # batch, source seq len, input feature dim
    H = 32                     # hidden dim
    O = 2                      # decoder output dim
    S = 4                      # target_seq_len

    key = jax.random.PRNGKey(0)
    ks = jax.random.split(key, 10)
    scale = 1.0 / jnp.sqrt(H)

    def u(k, shape):
        return jax.random.uniform(k, shape, jnp.float32, -scale, scale)

    params = {
        # encoder LSTM (weights stored transposed: columns are gates i,f,g,o)
        "enc_wih_t": u(ks[0], (D, 4 * H)),
        "enc_whh_t": u(ks[1], (H, 4 * H)),
        "enc_b":     u(ks[2], (1, 4 * H)) + u(ks[3], (1, 4 * H)),   # b_ih + b_hh
        # decoder LSTM cell (input size = output_dim)
        "dec_wih_t": u(ks[4], (O, 4 * H)),
        "dec_whh_t": u(ks[5], (H, 4 * H)),
        "dec_b":     u(ks[6], (1, 4 * H)) + u(ks[7], (1, 4 * H)),
        # decoder FC head
        "fc_w":      u(ks[8], (H, O)),
        "fc_b":      u(ks[9], (1, O)),
    }

    source = jax.random.normal(jax.random.PRNGKey(42), (B, T, D), jnp.float32)

    out = seq2seq_forward(params, source,
                          target_seq_len=S, hidden_dim=H, output_dim=O)
    out = jax.block_until_ready(out)
    assert out.shape == (B, S, O), out.shape

    ref = seq2seq_ref(params, source, S, H, O)
    assert jnp.allclose(out, ref, atol=1e-4, rtol=1e-4), (
        float(jnp.max(jnp.abs(out - ref))))

    print("KERNEL_OK")
</pallas_src>

<mosaic_0001>
module attributes {stable_mosaic.version = 11 : i64} {
  func.func @_seq2seq_kernel(%arg0: memref<16x8xf32, #tpu.memory_space<vmem>>, %arg1: memref<8x128xf32, #tpu.memory_space<vmem>>, %arg2: memref<32x128xf32, #tpu.memory_space<vmem>>, %arg3: memref<1x128xf32, #tpu.memory_space<vmem>>, %arg4: memref<8x128xf32, #tpu.memory_space<vmem>>, %arg5: memref<32x128xf32, #tpu.memory_space<vmem>>, %arg6: memref<1x128xf32, #tpu.memory_space<vmem>>, %arg7: memref<32x128xf32, #tpu.memory_space<vmem>>, %arg8: memref<1x128xf32, #tpu.memory_space<vmem>>, %arg9: memref<32x128xf32, #tpu.memory_space<vmem>>, %arg10: memref<1x128xf32, #tpu.memory_space<vmem>>, %arg11: memref<2x512xf32, #tpu.memory_space<vmem>>) attributes {dimension_semantics = [], scalar_prefetch = 0 : i64, scratch_operands = 0 : i64, tpu.core_type = #tpu.core_type<tc>} {
    %c0 = arith.constant 0 : index
    %c0_0 = arith.constant 0 : index
    %0 = vector.load %arg0[%c0, %c0_0] : memref<16x8xf32, #tpu.memory_space<vmem>>, vector<16x8xf32>
    %c0_1 = arith.constant 0 : index
    %c0_2 = arith.constant 0 : index
    %1 = vector.load %arg1[%c0_1, %c0_2] : memref<8x128xf32, #tpu.memory_space<vmem>>, vector<8x128xf32>
    %cst = arith.constant dense<0.000000e+00> : vector<16x128xf32>
    %2 = tpu.matmul %0, %1, %cst {dimension_numbers = #tpu.dot_dimension_numbers<[1], [0], [0], [1], [0, 0, 1, 1], [], []>} : vector<16x8xf32>, vector<8x128xf32>, vector<16x128xf32> -> vector<16x128xf32>
    %c0_3 = arith.constant 0 : index
    %c0_4 = arith.constant 0 : index
    %3 = vector.load %arg3[%c0_3, %c0_4] : memref<1x128xf32, #tpu.memory_space<vmem>>, vector<1x128xf32>
    %4 = vector.broadcast %3 : vector<1x128xf32> to vector<16x128xf32>
    %5 = arith.addf %2, %4 : vector<16x128xf32>
    %c0_5 = arith.constant 0 : index
    %c0_6 = arith.constant 0 : index
    %6 = vector.load %arg2[%c0_5, %c0_6] : memref<32x128xf32, #tpu.memory_space<vmem>>, vector<32x128xf32>
    %cst_7 = arith.constant 0.000000e+00 : f32
    %7 = vector.broadcast %cst_7 : f32 to vector<2x32xf32>
    %cst_8 = arith.constant 0.000000e+00 : f32
    %8 = vector.broadcast %cst_8 : f32 to vector<2x32xf32>
    %9 = vector.extract_strided_slice %5 {offsets = [0, 0], sizes = [2, 128], strides = [1, 1]} : vector<16x128xf32> to vector<2x128xf32>
    %cst_9 = arith.constant dense<0.000000e+00> : vector<2x128xf32>
    %10 = tpu.matmul %7, %6, %cst_9 {dimension_numbers = #tpu.dot_dimension_numbers<[1], [0], [0], [1], [0, 0, 1, 1], [], []>} : vector<2x32xf32>, vector<32x128xf32>, vector<2x128xf32> -> vector<2x128xf32>
    %11 = arith.addf %9, %10 : vector<2x128xf32>
    %12 = arith.negf %11 : vector<2x128xf32>
    %13 = math.exp %12 : vector<2x128xf32>
    %cst_10 = arith.constant 1.000000e+00 : f32
    %14 = vector.broadcast %cst_10 : f32 to vector<2x128xf32>
    %15 = arith.addf %14, %13 : vector<2x128xf32>
    %16 = arith.divf %14, %15 : vector<2x128xf32>
    %17 = math.tanh %11 : vector<2x128xf32>
    %18 = vector.extract_strided_slice %16 {offsets = [0, 0], sizes = [2, 32], strides = [1, 1]} : vector<2x128xf32> to vector<2x32xf32>
    %19 = vector.extract_strided_slice %16 {offsets = [0, 32], sizes = [2, 32], strides = [1, 1]} : vector<2x128xf32> to vector<2x32xf32>
    %20 = vector.extract_strided_slice %16 {offsets = [0, 96], sizes = [2, 32], strides = [1, 1]} : vector<2x128xf32> to vector<2x32xf32>
    %21 = vector.extract_strided_slice %17 {offsets = [0, 64], sizes = [2, 32], strides = [1, 1]} : vector<2x128xf32> to vector<2x32xf32>
    %22 = arith.mulf %19, %8 : vector<2x32xf32>
    %23 = arith.mulf %18, %21 : vector<2x32xf32>
    %24 = arith.addf %22, %23 : vector<2x32xf32>
    %25 = math.tanh %24 : vector<2x32xf32>
    %26 = arith.mulf %20, %25 : vector<2x32xf32>
    %27 = vector.extract_strided_slice %5 {offsets = [2, 0], sizes = [2, 128], strides = [1, 1]} : vector<16x128xf32> to vector<2x128xf32>
    %cst_11 = arith.constant dense<0.000000e+00> : vector<2x128xf32>
    %28 = tpu.matmul %26, %6, %cst_11 {dimension_numbers = #tpu.dot_dimension_numbers<[1], [0], [0], [1], [0, 0, 1, 1], [], []>} : vector<2x32xf32>, vector<32x128xf32>, vector<2x128xf32> -> vector<2x128xf32>
    %29 = arith.addf %27, %28 : vector<2x128xf32>
    %30 = arith.negf %29 : vector<2x128xf32>
    %31 = math.exp %30 : vector<2x128xf32>
    %cst_12 = arith.constant 1.000000e+00 : f32
    %32 = vector.broadcast %cst_12 : f32 to vector<2x128xf32>
    %33 = arith.addf %32, %31 : vector<2x128xf32>
    %34 = arith.divf %32, %33 : vector<2x128xf32>
    %35 = math.tanh %29 : vector<2x128xf32>
    %36 = vector.extract_strided_slice %34 {offsets = [0, 0], sizes = [2, 32], strides = [1, 1]} : vector<2x128xf32> to vector<2x32xf32>
    %37 = vector.extract_strided_slice %34 {offsets = [0, 32], sizes = [2, 32], strides = [1, 1]} : vector<2x128xf32> to vector<2x32xf32>
    %38 = vector.extract_strided_slice %34 {offsets = [0, 96], sizes = [2, 32], strides = [1, 1]} : vector<2x128xf32> to vector<2x32xf32>
    %39 = vector.extract_strided_slice %35 {offsets = [0, 64], sizes = [2, 32], strides = [1, 1]} : vector<2x128xf32> to vector<2x32xf32>
    %40 = arith.mulf %37, %24 : vector<2x32xf32>
    %41 = arith.mulf %36, %39 : vector<2x32xf32>
    %42 = arith.addf %40, %41 : vector<2x32xf32>
    %43 = math.tanh %42 : vector<2x32xf32>
    %44 = arith.mulf %38, %43 : vector<2x32xf32>
    %45 = vector.extract_strided_slice %5 {offsets = [4, 0], sizes = [2, 128], strides = [1, 1]} : vector<16x128xf32> to vector<2x128xf32>
    %cst_13 = arith.constant dense<0.000000e+00> : vector<2x128xf32>
    %46 = tpu.matmul %44, %6, %cst_13 {dimension_numbers = #tpu.dot_dimension_numbers<[1], [0], [0], [1], [0, 0, 1, 1], [], []>} : vector<2x32xf32>, vector<32x128xf32>, vector<2x128xf32> -> vector<2x128xf32>
    %47 = arith.addf %45, %46 : vector<2x128xf32>
    %48 = arith.negf %47 : vector<2x128xf32>
    %49 = math.exp %48 : vector<2x128xf32>
    %cst_14 = arith.constant 1.000000e+00 : f32
    %50 = vector.broadcast %cst_14 : f32 to vector<2x128xf32>
    %51 = arith.addf %50, %49 : vector<2x128xf32>
    %52 = arith.divf %50, %51 : vector<2x128xf32>
    %53 = math.tanh %47 : vector<2x128xf32>
    %54 = vector.extract_strided_slice %52 {offsets = [0, 0], sizes = [2, 32], strides = [1, 1]} : vector<2x128xf32> to vector<2x32xf32>
    %55 = vector.extract_strided_slice %52 {offsets = [0, 32], sizes = [2, 32], strides = [1, 1]} : vector<2x128xf32> to vector<2x32xf32>
    %56 = vector.extract_strided_slice %52 {offsets = [0, 96], sizes = [2, 32], strides = [1, 1]} : vector<2x128xf32> to vector<2x32xf32>
    %57 = vector.extract_strided_slice %53 {offsets = [0, 64], sizes = [2, 32], strides = [1, 1]} : vector<2x128xf32> to vector<2x32xf32>
    %58 = arith.mulf %55, %42 : vector<2x32xf32>
    %59 = arith.mulf %54, %57 : vector<2x32xf32>
    %60 = arith.addf %58, %59 : vector<2x32xf32>
    %61 = math.tanh %60 : vector<2x32xf32>
    %62 = arith.mulf %56, %61 : vector<2x32xf32>
    %63 = vector.extract_strided_slice %5 {offsets = [6, 0], sizes = [2, 128], strides = [1, 1]} : vector<16x128xf32> to vector<2x128xf32>
    %cst_15 = arith.constant dense<0.000000e+00> : vector<2x128xf32>
    %64 = tpu.matmul %62, %6, %cst_15 {dimension_numbers = #tpu.dot_dimension_numbers<[1], [0], [0], [1], [0, 0, 1, 1], [], []>} : vector<2x32xf32>, vector<32x128xf32>, vector<2x128xf32> -> vector<2x128xf32>
    %65 = arith.addf %63, %64 : vector<2x128xf32>
    %66 = arith.negf %65 : vector<2x128xf32>
    %67 = math.exp %66 : vector<2x128xf32>
    %cst_16 = arith.constant 1.000000e+00 : f32
    %68 = vector.broadcast %cst_16 : f32 to vector<2x128xf32>
    %69 = arith.addf %68, %67 : vector<2x128xf32>
    %70 = arith.divf %68, %69 : vector<2x128xf32>
    %71 = math.tanh %65 : vector<2x128xf32>
    %72 = vector.extract_strided_slice %70 {offsets = [0, 0], sizes = [2, 32], strides = [1, 1]} : vector<2x128xf32> to vector<2x32xf32>
    %73 = vector.extract_strided_slice %70 {offsets = [0, 32], sizes = [2, 32], strides = [1, 1]} : vector<2x128xf32> to vector<2x32xf32>
    %74 = vector.extract_strided_slice %70 {offsets = [0, 96], sizes = [2, 32], strides = [1, 1]} : vector<2x128xf32> to vector<2x32xf32>
    %75 = vector.extract_strided_slice %71 {offsets = [0, 64], sizes = [2, 32], strides = [1, 1]} : vector<2x128xf32> to vector<2x32xf32>
    %76 = arith.mulf %73, %60 : vector<2x32xf32>
    %77 = arith.mulf %72, %75 : vector<2x32xf32>
    %78 = arith.addf %76, %77 : vector<2x32xf32>
    %79 = math.tanh %78 : vector<2x32xf32>
    %80 = arith.mulf %74, %79 : vector<2x32xf32>
    %81 = vector.extract_strided_slice %5 {offsets = [8, 0], sizes = [2, 128], strides = [1, 1]} : vector<16x128xf32> to vector<2x128xf32>
    %cst_17 = arith.constant dense<0.000000e+00> : vector<2x128xf32>
    %82 = tpu.matmul %80, %6, %cst_17 {dimension_numbers = #tpu.dot_dimension_numbers<[1], [0], [0], [1], [0, 0, 1, 1], [], []>} : vector<2x32xf32>, vector<32x128xf32>, vector<2x128xf32> -> vector<2x128xf32>
    %83 = arith.addf %81, %82 : vector<2x128xf32>
    %84 = arith.negf %83 : vector<2x128xf32>
    %85 = math.exp %84 : vector<2x128xf32>
    %cst_18 = arith.constant 1.000000e+00 : f32
    %86 = vector.broadcast %cst_18 : f32 to vector<2x128xf32>
    %87 = arith.addf %86, %85 : vector<2x128xf32>
    %88 = arith.divf %86, %87 : vector<2x128xf32>
    %89 = math.tanh %83 : vector<2x128xf32>
    %90 = vector.extract_strided_slice %88 {offsets = [0, 0], sizes = [2, 32], strides = [1, 1]} : vector<2x128xf32> to vector<2x32xf32>
    %91 = vector.extract_strided_slice %88 {offsets = [0, 32], sizes = [2, 32], strides = [1, 1]} : vector<2x128xf32> to vector<2x32xf32>
    %92 = vector.extract_strided_slice %88 {offsets = [0, 96], sizes = [2, 32], strides = [1, 1]} : vector<2x128xf32> to vector<2x32xf32>
    %93 = vector.extract_strided_slice %89 {offsets = [0, 64], sizes = [2, 32], strides = [1, 1]} : vector<2x128xf32> to vector<2x32xf32>
    %94 = arith.mulf %91, %78 : vector<2x32xf32>
    %95 = arith.mulf %90, %93 : vector<2x32xf32>
    %96 = arith.addf %94, %95 : vector<2x32xf32>
    %97 = math.tanh %96 : vector<2x32xf32>
    %98 = arith.mulf %92, %97 : vector<2x32xf32>
    %99 = vector.extract_strided_slice %5 {offsets = [10, 0], sizes = [2, 128], strides = [1, 1]} : vector<16x128xf32> to vector<2x128xf32>
    %cst_19 = arith.constant dense<0.000000e+00> : vector<2x128xf32>
    %100 = tpu.matmul %98, %6, %cst_19 {dimension_numbers = #tpu.dot_dimension_numbers<[1], [0], [0], [1], [0, 0, 1, 1], [], []>} : vector<2x32xf32>, vector<32x128xf32>, vector<2x128xf32> -> vector<2x128xf32>
    %101 = arith.addf %99, %100 : vector<2x128xf32>
    %102 = arith.negf %101 : vector<2x128xf32>
    %103 = math.exp %102 : vector<2x128xf32>
    %cst_20 = arith.constant 1.000000e+00 : f32
    %104 = vector.broadcast %cst_20 : f32 to vector<2x128xf32>
    %105 = arith.addf %104, %103 : vector<2x128xf32>
    %106 = arith.divf %104, %105 : vector<2x128xf32>
    %107 = math.tanh %101 : vector<2x128xf32>
    %108 = vector.extract_strided_slice %106 {offsets = [0, 0], sizes = [2, 32], strides = [1, 1]} : vector<2x128xf32> to vector<2x32xf32>
    %109 = vector.extract_strided_slice %106 {offsets = [0, 32], sizes = [2, 32], strides = [1, 1]} : vector<2x128xf32> to vector<2x32xf32>
    %110 = vector.extract_strided_slice %106 {offsets = [0, 96], sizes = [2, 32], strides = [1, 1]} : vector<2x128xf32> to vector<2x32xf32>
    %111 = vector.extract_strided_slice %107 {offsets = [0, 64], sizes = [2, 32], strides = [1, 1]} : vector<2x128xf32> to vector<2x32xf32>
    %112 = arith.mulf %109, %96 : vector<2x32xf32>
    %113 = arith.mulf %108, %111 : vector<2x32xf32>
    %114 = arith.addf %112, %113 : vector<2x32xf32>
    %115 = math.tanh %114 : vector<2x32xf32>
    %116 = arith.mulf %110, %115 : vector<2x32xf32>
    %117 = vector.extract_strided_slice %5 {offsets = [12, 0], sizes = [2, 128], strides = [1, 1]} : vector<16x128xf32> to vector<2x128xf32>
    %cst_21 = arith.constant dense<0.000000e+00> : vector<2x128xf32>
    %118 = tpu.matmul %116, %6, %cst_21 {dimension_numbers = #tpu.dot_dimension_numbers<[1], [0], [0], [1], [0, 0, 1, 1], [], []>} : vector<2x32xf32>, vector<32x128xf32>, vector<2x128xf32> -> vector<2x128xf32>
    %119 = arith.addf %117, %118 : vector<2x128xf32>
    %120 = arith.negf %119 : vector<2x128xf32>
    %121 = math.exp %120 : vector<2x128xf32>
    %cst_22 = arith.constant 1.000000e+00 : f32
    %122 = vector.broadcast %cst_22 : f32 to vector<2x128xf32>
    %123 = arith.addf %122, %121 : vector<2x128xf32>
    %124 = arith.divf %122, %123 : vector<2x128xf32>
    %125 = math.tanh %119 : vector<2x128xf32>
    %126 = vector.extract_strided_slice %124 {offsets = [0, 0], sizes = [2, 32], strides = [1, 1]} : vector<2x128xf32> to vector<2x32xf32>
    %127 = vector.extract_strided_slice %124 {offsets = [0, 32], sizes = [2, 32], strides = [1, 1]} : vector<2x128xf32> to vector<2x32xf32>
    %128 = vector.extract_strided_slice %124 {offsets = [0, 96], sizes = [2, 32], strides = [1, 1]} : vector<2x128xf32> to vector<2x32xf32>
    %129 = vector.extract_strided_slice %125 {offsets = [0, 64], sizes = [2, 32], strides = [1, 1]} : vector<2x128xf32> to vector<2x32xf32>
    %130 = arith.mulf %127, %114 : vector<2x32xf32>
    %131 = arith.mulf %126, %129 : vector<2x32xf32>
    %132 = arith.addf %130, %131 : vector<2x32xf32>
    %133 = math.tanh %132 : vector<2x32xf32>
    %134 = arith.mulf %128, %133 : vector<2x32xf32>
    %135 = vector.extract_strided_slice %5 {offsets = [14, 0], sizes = [2, 128], strides = [1, 1]} : vector<16x128xf32> to vector<2x128xf32>
    %cst_23 = arith.constant dense<0.000000e+00> : vector<2x128xf32>
    %136 = tpu.matmul %134, %6, %cst_23 {dimension_numbers = #tpu.dot_dimension_numbers<[1], [0], [0], [1], [0, 0, 1, 1], [], []>} : vector<2x32xf32>, vector<32x128xf32>, vector<2x128xf32> -> vector<2x128xf32>
    %137 = arith.addf %135, %136 : vector<2x128xf32>
    %138 = arith.negf %137 : vector<2x128xf32>
    %139 = math.exp %138 : vector<2x128xf32>
    %cst_24 = arith.constant 1.000000e+00 : f32
    %140 = vector.broadcast %cst_24 : f32 to vector<2x128xf32>
    %141 = arith.addf %140, %139 : vector<2x128xf32>
    %142 = arith.divf %140, %141 : vector<2x128xf32>
    %143 = math.tanh %137 : vector<2x128xf32>
    %144 = vector.extract_strided_slice %142 {offsets = [0, 0], sizes = [2, 32], strides = [1, 1]} : vector<2x128xf32> to vector<2x32xf32>
    %145 = vector.extract_strided_slice %142 {offsets = [0, 32], sizes = [2, 32], strides = [1, 1]} : vector<2x128xf32> to vector<2x32xf32>
    %146 = vector.extract_strided_slice %142 {offsets = [0, 96], sizes = [2, 32], strides = [1, 1]} : vector<2x128xf32> to vector<2x32xf32>
    %147 = vector.extract_strided_slice %143 {offsets = [0, 64], sizes = [2, 32], strides = [1, 1]} : vector<2x128xf32> to vector<2x32xf32>
    %148 = arith.mulf %145, %132 : vector<2x32xf32>
    %149 = arith.mulf %144, %147 : vector<2x32xf32>
    %150 = arith.addf %148, %149 : vector<2x32xf32>
    %151 = math.tanh %150 : vector<2x32xf32>
    %152 = arith.mulf %146, %151 : vector<2x32xf32>
    %c14 = arith.constant 14 : index
    %c0_25 = arith.constant 0 : index
    %153 = vector.load %arg0[%c14, %c0_25] : memref<16x8xf32, #tpu.memory_space<vmem>>, vector<2x8xf32>
    %c0_26 = arith.constant 0 : index
    %c0_27 = arith.constant 0 : index
    %154 = vector.load %arg4[%c0_26, %c0_27] : memref<8x128xf32, #tpu.memory_space<vmem>>, vector<8x128xf32>
    %cst_28 = arith.constant dense<0.000000e+00> : vector<2x128xf32>
    %155 = tpu.matmul %153, %154, %cst_28 {dimension_numbers = #tpu.dot_dimension_numbers<[1], [0], [0], [1], [0, 0, 1, 1], [], []>} : vector<2x8xf32>, vector<8x128xf32>, vector<2x128xf32> -> vector<2x128xf32>
    %c0_29 = arith.constant 0 : index
    %c0_30 = arith.constant 0 : index
    %156 = vector.load %arg5[%c0_29, %c0_30] : memref<32x128xf32, #tpu.memory_space<vmem>>, vector<32x128xf32>
    %cst_31 = arith.constant dense<0.000000e+00> : vector<2x128xf32>
    %157 = tpu.matmul %152, %156, %cst_31 {dimension_numbers = #tpu.dot_dimension_numbers<[1], [0], [0], [1], [0, 0, 1, 1], [], []>} : vector<2x32xf32>, vector<32x128xf32>, vector<2x128xf32> -> vector<2x128xf32>
    %158 = arith.addf %155, %157 : vector<2x128xf32>
    %c0_32 = arith.constant 0 : index
    %c0_33 = arith.constant 0 : index
    %159 = vector.load %arg6[%c0_32, %c0_33] : memref<1x128xf32, #tpu.memory_space<vmem>>, vector<1x128xf32>
    %160 = vector.broadcast %159 : vector<1x128xf32> to vector<2x128xf32>
    %161 = arith.addf %158, %160 : vector<2x128xf32>
    %162 = arith.negf %161 : vector<2x128xf32>
    %163 = math.exp %162 : vector<2x128xf32>
    %cst_34 = arith.constant 1.000000e+00 : f32
    %164 = vector.broadcast %cst_34 : f32 to vector<2x128xf32>
    %165 = arith.addf %164, %163 : vector<2x128xf32>
    %166 = arith.divf %164, %165 : vector<2x128xf32>
    %167 = math.tanh %161 : vector<2x128xf32>
    %168 = vector.extract_strided_slice %166 {offsets = [0, 0], sizes = [2, 32], strides = [1, 1]} : vector<2x128xf32> to vector<2x32xf32>
    %169 = vector.extract_strided_slice %166 {offsets = [0, 32], sizes = [2, 32], strides = [1, 1]} : vector<2x128xf32> to vector<2x32xf32>
    %170 = vector.extract_strided_slice %166 {offsets = [0, 96], sizes = [2, 32], strides = [1, 1]} : vector<2x128xf32> to vector<2x32xf32>
    %171 = vector.extract_strided_slice %167 {offsets = [0, 64], sizes = [2, 32], strides = [1, 1]} : vector<2x128xf32> to vector<2x32xf32>
    %172 = arith.mulf %169, %150 : vector<2x32xf32>
    %173 = arith.mulf %168, %171 : vector<2x32xf32>
    %174 = arith.addf %172, %173 : vector<2x32xf32>
    %175 = math.tanh %174 : vector<2x32xf32>
    %176 = arith.mulf %170, %175 : vector<2x32xf32>
    %c0_35 = arith.constant 0 : index
    %c0_36 = arith.constant 0 : index
    %177 = vector.load %arg9[%c0_35, %c0_36] : memref<32x128xf32, #tpu.memory_space<vmem>>, vector<32x128xf32>
    %c0_37 = arith.constant 0 : index
    %c0_38 = arith.constant 0 : index
    %178 = vector.load %arg10[%c0_37, %c0_38] : memref<1x128xf32, #tpu.memory_space<vmem>>, vector<1x128xf32>
    %179 = vector.shape_cast %178 : vector<1x128xf32> to vector<1x128xf32>
    %180 = vector.broadcast %179 : vector<1x128xf32> to vector<2x128xf32>
    %c0_39 = arith.constant 0 : index
    %c0_40 = arith.constant 0 : index
    %181 = vector.load %arg7[%c0_39, %c0_40] : memref<32x128xf32, #tpu.memory_space<vmem>>, vector<32x128xf32>
    %c0_41 = arith.constant 0 : index
    %c0_42 = arith.constant 0 : index
    %182 = vector.load %arg8[%c0_41, %c0_42] : memref<1x128xf32, #tpu.memory_space<vmem>>, vector<1x128xf32>
    %183 = vector.shape_cast %182 : vector<1x128xf32> to vector<1x128xf32>
    %184 = vector.broadcast %183 : vector<1x128xf32> to vector<2x128xf32>
    %cst_43 = arith.constant dense<0.000000e+00> : vector<2x128xf32>
    %185 = tpu.matmul %176, %177, %cst_43 {dimension_numbers = #tpu.dot_dimension_numbers<[1], [0], [0], [1], [0, 0, 1, 1], [], []>} : vector<2x32xf32>, vector<32x128xf32>, vector<2x128xf32> -> vector<2x128xf32>
    %186 = arith.addf %185, %180 : vector<2x128xf32>
    %c0_44 = arith.constant 0 : index
    %c0_45 = arith.constant 0 : index
    %187 = vector.load %arg11[%c0_44, %c0_45] : memref<2x512xf32, #tpu.memory_space<vmem>>, vector<2x128xf32>
    tpu.vector_store %arg11[%c0_44, %c0_45], %186 {strides = array<i32>} : memref<2x512xf32, #tpu.memory_space<vmem>>, vector<2x128xf32>,
    %cst_46 = arith.constant dense<0.000000e+00> : vector<2x128xf32>
    %188 = tpu.matmul %176, %181, %cst_46 {dimension_numbers = #tpu.dot_dimension_numbers<[1], [0], [0], [1], [0, 0, 1, 1], [], []>} : vector<2x32xf32>, vector<32x128xf32>, vector<2x128xf32> -> vector<2x128xf32>
    %189 = arith.addf %188, %184 : vector<2x128xf32>
    %190 = arith.negf %189 : vector<2x128xf32>
    %191 = math.exp %190 : vector<2x128xf32>
    %cst_47 = arith.constant 1.000000e+00 : f32
    %192 = vector.broadcast %cst_47 : f32 to vector<2x128xf32>
    %193 = arith.addf %192, %191 : vector<2x128xf32>
    %194 = arith.divf %192, %193 : vector<2x128xf32>
    %195 = math.tanh %189 : vector<2x128xf32>
    %196 = vector.extract_strided_slice %194 {offsets = [0, 0], sizes = [2, 32], strides = [1, 1]} : vector<2x128xf32> to vector<2x32xf32>
    %197 = vector.extract_strided_slice %194 {offsets = [0, 32], sizes = [2, 32], strides = [1, 1]} : vector<2x128xf32> to vector<2x32xf32>
    %198 = vector.extract_strided_slice %194 {offsets = [0, 96], sizes = [2, 32], strides = [1, 1]} : vector<2x128xf32> to vector<2x32xf32>
    %199 = vector.extract_strided_slice %195 {offsets = [0, 64], sizes = [2, 32], strides = [1, 1]} : vector<2x128xf32> to vector<2x32xf32>
    %200 = arith.mulf %197, %174 : vector<2x32xf32>
    %201 = arith.mulf %196, %199 : vector<2x32xf32>
    %202 = arith.addf %200, %201 : vector<2x32xf32>
    %203 = math.tanh %202 : vector<2x32xf32>
    %204 = arith.mulf %198, %203 : vector<2x32xf32>
    %cst_48 = arith.constant dense<0.000000e+00> : vector<2x128xf32>
    %205 = tpu.matmul %204, %177, %cst_48 {dimension_numbers = #tpu.dot_dimension_numbers<[1], [0], [0], [1], [0, 0, 1, 1], [], []>} : vector<2x32xf32>, vector<32x128xf32>, vector<2x128xf32> -> vector<2x128xf32>
    %206 = arith.addf %205, %180 : vector<2x128xf32>
    %c0_49 = arith.constant 0 : index
    %c128 = arith.constant 128 : index
    %207 = vector.load %arg11[%c0_49, %c128] : memref<2x512xf32, #tpu.memory_space<vmem>>, vector<2x128xf32>
    tpu.vector_store %arg11[%c0_49, %c128], %206 {strides = array<i32>} : memref<2x512xf32, #tpu.memory_space<vmem>>, vector<2x128xf32>,
    %cst_50 = arith.constant dense<0.000000e+00> : vector<2x128xf32>
    %208 = tpu.matmul %204, %181, %cst_50 {dimension_numbers = #tpu.dot_dimension_numbers<[1], [0], [0], [1], [0, 0, 1, 1], [], []>} : vector<2x32xf32>, vector<32x128xf32>, vector<2x128xf32> -> vector<2x128xf32>
    %209 = arith.addf %208, %184 : vector<2x128xf32>
    %210 = arith.negf %209 : vector<2x128xf32>
    %211 = math.exp %210 : vector<2x128xf32>
    %cst_51 = arith.constant 1.000000e+00 : f32
    %212 = vector.broadcast %cst_51 : f32 to vector<2x128xf32>
    %213 = arith.addf %212, %211 : vector<2x128xf32>
    %214 = arith.divf %212, %213 : vector<2x128xf32>
    %215 = math.tanh %209 : vector<2x128xf32>
    %216 = vector.extract_strided_slice %214 {offsets = [0, 0], sizes = [2, 32], strides = [1, 1]} : vector<2x128xf32> to vector<2x32xf32>
    %217 = vector.extract_strided_slice %214 {offsets = [0, 32], sizes = [2, 32], strides = [1, 1]} : vector<2x128xf32> to vector<2x32xf32>
    %218 = vector.extract_strided_slice %214 {offsets = [0, 96], sizes = [2, 32], strides = [1, 1]} : vector<2x128xf32> to vector<2x32xf32>
    %219 = vector.extract_strided_slice %215 {offsets = [0, 64], sizes = [2, 32], strides = [1, 1]} : vector<2x128xf32> to vector<2x32xf32>
    %220 = arith.mulf %217, %202 : vector<2x32xf32>
    %221 = arith.mulf %216, %219 : vector<2x32xf32>
    %222 = arith.addf %220, %221 : vector<2x32xf32>
    %223 = math.tanh %222 : vector<2x32xf32>
    %224 = arith.mulf %218, %223 : vector<2x32xf32>
    %cst_52 = arith.constant dense<0.000000e+00> : vector<2x128xf32>
    %225 = tpu.matmul %224, %177, %cst_52 {dimension_numbers = #tpu.dot_dimension_numbers<[1], [0], [0], [1], [0, 0, 1, 1], [], []>} : vector<2x32xf32>, vector<32x128xf32>, vector<2x128xf32> -> vector<2x128xf32>
    %226 = arith.addf %225, %180 : vector<2x128xf32>
    %c0_53 = arith.constant 0 : index
    %c256 = arith.constant 256 : index
    %227 = vector.load %arg11[%c0_53, %c256] : memref<2x512xf32, #tpu.memory_space<vmem>>, vector<2x128xf32>
    tpu.vector_store %arg11[%c0_53, %c256], %226 {strides = array<i32>} : memref<2x512xf32, #tpu.memory_space<vmem>>, vector<2x128xf32>,
    %cst_54 = arith.constant dense<0.000000e+00> : vector<2x128xf32>
    %228 = tpu.matmul %224, %181, %cst_54 {dimension_numbers = #tpu.dot_dimension_numbers<[1], [0], [0], [1], [0, 0, 1, 1], [], []>} : vector<2x32xf32>, vector<32x128xf32>, vector<2x128xf32> -> vector<2x128xf32>
    %229 = arith.addf %228, %184 : vector<2x128xf32>
    %230 = arith.negf %229 : vector<2x128xf32>
    %231 = math.exp %230 : vector<2x128xf32>
    %cst_55 = arith.constant 1.000000e+00 : f32
    %232 = vector.broadcast %cst_55 : f32 to vector<2x128xf32>
    %233 = arith.addf %232, %231 : vector<2x128xf32>
    %234 = arith.divf %232, %233 : vector<2x128xf32>
    %235 = math.tanh %229 : vector<2x128xf32>
    %236 = vector.extract_strided_slice %234 {offsets = [0, 0], sizes = [2, 32], strides = [1, 1]} : vector<2x128xf32> to vector<2x32xf32>
    %237 = vector.extract_strided_slice %234 {offsets = [0, 32], sizes = [2, 32], strides = [1, 1]} : vector<2x128xf32> to vector<2x32xf32>
    %238 = vector.extract_strided_slice %234 {offsets = [0, 96], sizes = [2, 32], strides = [1, 1]} : vector<2x128xf32> to vector<2x32xf32>
    %239 = vector.extract_strided_slice %235 {offsets = [0, 64], sizes = [2, 32], strides = [1, 1]} : vector<2x128xf32> to vector<2x32xf32>
    %240 = arith.mulf %237, %222 : vector<2x32xf32>
    %241 = arith.mulf %236, %239 : vector<2x32xf32>
    %242 = arith.addf %240, %241 : vector<2x32xf32>
    %243 = math.tanh %242 : vector<2x32xf32>
    %244 = arith.mulf %238, %243 : vector<2x32xf32>
    %cst_56 = arith.constant dense<0.000000e+00> : vector<2x128xf32>
    %245 = tpu.matmul %244, %177, %cst_56 {dimension_numbers = #tpu.dot_dimension_numbers<[1], [0], [0], [1], [0, 0, 1, 1], [], []>} : vector<2x32xf32>, vector<32x128xf32>, vector<2x128xf32> -> vector<2x128xf32>
    %246 = arith.addf %245, %180 : vector<2x128xf32>
    %c0_57 = arith.constant 0 : index
    %c384 = arith.constant 384 : index
    %247 = vector.load %arg11[%c0_57, %c384] : memref<2x512xf32, #tpu.memory_space<vmem>>, vector<2x128xf32>
    tpu.vector_store %arg11[%c0_57, %c384], %246 {strides = array<i32>} : memref<2x512xf32, #tpu.memory_space<vmem>>, vector<2x128xf32>,
    return
  }
}

</mosaic_0001>

<llo_original>
// kernel: seq2seq_forward.1
$region0: #{seq2seq_forward.1}
  #allocation0 [shape = 'u32[]', space=smem, size = 0x4, offset = 0x4, fixed_abs, tag = 'smem constant byte address 0x4 - core index']
  #allocation1 [shape = 'u32[72,128]{1,0:T(1,128)}', space=vmem, size = 0x9000, scoped, tag = 'internal scratch']
  %s0 = inlined_call_operand.vmem [shape: f32[16,8], index: 0, kind: input, shape index: {}]
  %s1 = inlined_call_operand.vmem [shape: f32[8,128], index: 1, kind: input, shape index: {}]
  %s2 = inlined_call_operand.vmem [shape: f32[32,128], index: 2, kind: input, shape index: {}]
  %s3 = inlined_call_operand.vmem [shape: f32[1,128], index: 3, kind: input, shape index: {}]
  %s4 = inlined_call_operand.vmem [shape: f32[8,128], index: 4, kind: input, shape index: {}]
  %s5 = inlined_call_operand.vmem [shape: f32[32,128], index: 5, kind: input, shape index: {}]
  %s6 = inlined_call_operand.vmem [shape: f32[1,128], index: 6, kind: input, shape index: {}]
  %s7 = inlined_call_operand.vmem [shape: f32[32,128], index: 7, kind: input, shape index: {}]
  %s8 = inlined_call_operand.vmem [shape: f32[1,128], index: 8, kind: input, shape index: {}]
  %s9 = inlined_call_operand.vmem [shape: f32[32,128], index: 9, kind: input, shape index: {}]
  %s10 = inlined_call_operand.vmem [shape: f32[1,128], index: 10, kind: input, shape index: {}]
  %s11 = inlined_call_operand.vmem [shape: f32[2,512], index: 11, kind: output, shape index: {}]
  %s12 = sld [smem:[#allocation0]]
  $region54: #{seq2seq_forward.1} parent=0
    _
  %s14 = ssub.s32 1, %s12
  %s15 = scalar_select 0, %s14, %s12
  // Predicated region
  $region2: #{seq2seq_forward.1} parent=0 // pred_check
    _
  $region3: #{seq2seq_forward.1} parent=0 // pred_check_branch
    %17 = sbr.rel (0) target = $region5
  $region4: #{seq2seq_forward.1} parent=0 // pred_region
    _
  $region5: #{seq2seq_forward.1} parent=0 // pred_fallthru
    _
  // Predicated region
  $region6: #{seq2seq_forward.1} parent=0 // pred_check
    _
  $region7: #{seq2seq_forward.1} parent=0 // pred_check_branch
    %19 = sbr.rel (0) target = $region9
  $region8: #{seq2seq_forward.1} parent=0 // pred_region
    _
  $region9: #{seq2seq_forward.1} parent=0 // pred_fallthru
    _
  // Predicated region
  $region10: #{seq2seq_forward.1} parent=0 // pred_check
    _
  $region11: #{seq2seq_forward.1} parent=0 // pred_check_branch
    %21 = sbr.rel (0) target = $region13
  $region12: #{seq2seq_forward.1} parent=0 // pred_region
    _
  $region13: #{seq2seq_forward.1} parent=0 // pred_fallthru
    _
  // Predicated region
  $region14: #{seq2seq_forward.1} parent=0 // pred_check
    _
  $region15: #{seq2seq_forward.1} parent=0 // pred_check_branch
    %23 = sbr.rel (0) target = $region17
  $region16: #{seq2seq_forward.1} parent=0 // pred_region
    _
  $region17: #{seq2seq_forward.1} parent=0 // pred_fallthru
    _
  // Predicated region
  $region18: #{seq2seq_forward.1} parent=0 // pred_check
    _
  $region19: #{seq2seq_forward.1} parent=0 // pred_check_branch
    %25 = sbr.rel (0) target = $region21
  $region20: #{seq2seq_forward.1} parent=0 // pred_region
    _
  $region21: #{seq2seq_forward.1} parent=0 // pred_fallthru
    _
  // Predicated region
  $region22: #{seq2seq_forward.1} parent=0 // pred_check
    _
  $region23: #{seq2seq_forward.1} parent=0 // pred_check_branch
    %27 = sbr.rel (0) target = $region25
  $region24: #{seq2seq_forward.1} parent=0 // pred_region
    _
  $region25: #{seq2seq_forward.1} parent=0 // pred_fallthru
    _
  // Predicated region
  $region26: #{seq2seq_forward.1} parent=0 // pred_check
    _
  $region27: #{seq2seq_forward.1} parent=0 // pred_check_branch
    %29 = sbr.rel (0) target = $region29
  $region28: #{seq2seq_forward.1} parent=0 // pred_region
    _
  $region29: #{seq2seq_forward.1} parent=0 // pred_fallthru
    _
  // Predicated region
  $region30: #{seq2seq_forward.1} parent=0 // pred_check
    _
  $region31: #{seq2seq_forward.1} parent=0 // pred_check_branch
    %31 = sbr.rel (0) target = $region33
  $region32: #{seq2seq_forward.1} parent=0 // pred_region
    _
  $region33: #{seq2seq_forward.1} parent=0 // pred_fallthru
    _
  // Predicated region
  $region34: #{seq2seq_forward.1} parent=0 // pred_check
    _
  $region35: #{seq2seq_forward.1} parent=0 // pred_check_branch
    %33 = sbr.rel (0) target = $region37
  $region36: #{seq2seq_forward.1} parent=0 // pred_region
    _
  $region37: #{seq2seq_forward.1} parent=0 // pred_fallthru
    _
  // Predicated region
  $region38: #{seq2seq_forward.1} parent=0 // pred_check
    _
  $region39: #{seq2seq_forward.1} parent=0 // pred_check_branch
    %35 = sbr.rel (0) target = $region41
  $region40: #{seq2seq_forward.1} parent=0 // pred_region
    _
  $region41: #{seq2seq_forward.1} parent=0 // pred_fallthru
    _
  // Predicated region
  $region42: #{seq2seq_forward.1} parent=0 // pred_check
    _
  $region43: #{seq2seq_forward.1} parent=0 // pred_check_branch
    %37 = sbr.rel (0) target = $region45
  $region44: #{seq2seq_forward.1} parent=0 // pred_region
    _
  $region45: #{seq2seq_forward.1} parent=0 // pred_fallthru
    _
  %v38 = vld [vmem:[%s0] sm:$0xff]
  %v39 = vld [vmem:[%s0 + $0x8] sm:$0xff]
  %v40 = vld [vmem:[%s1] sm:$0xff]
  %v41 = vld [vmem:[%s3] sm:$0x1]
  %v43 = vperm.slane %v41, 0
  %vm45 = vcmask 64512
  %v47 = vsel %vm45, %v38, 0
  %v50 = vsel %vm45, %v39, 0
  %52 = vmatpush.msra.mxu0 0.0
  %53 = vmatpush.msra.mxu0 0.0
  %54 = vmatpush.msra.mxu0 0.0
  %55 = vmatpush.msra.mxu0 0.0
  %56 = vmatpush.msra.mxu0 0.0
  %57 = vmatpush.msra.mxu0 0.0
  %58 = vmatpush.msra.mxu0 0.0
  %59 = vmatpush.msra.mxu0 0.0
  %60 = vmatpush.msra.mxu0 0.0
  %61 = vmatpush.msra.mxu0 0.0
  %62 = vmatpush.msra.mxu0 0.0
  %63 = vmatpush.msra.mxu0 0.0
  %64 = vmatpush.msra.mxu0 0.0
  %65 = vmatpush.msra.mxu0 0.0
  %66 = vmatpush.msra.mxu0 0.0
  %67 = vmatpush.msra.mxu0 %v40
  %68 = vmatmul.f32.gmra.mxu0 %v47
  %v69 = vpop.f32.mrf.mxu0
  %v70 = vadd.f32 %v43, %v69
  %71 = vmatmul.f32.gmra.mxu0 %v50
  %v72 = vpop.f32.mrf.mxu0
  %v73 = vadd.f32 %v43, %v72
  %74 = vdwg.mxu0
  %v75 = vld [vmem:[%s2] sm:$0xff]
  %v76 = vld [vmem:[%s2 + $0x8] sm:$0xff]
  %v77 = vld [vmem:[%s2 + $0x10] sm:$0xff]
  %v78 = vld [vmem:[%s2 + $0x18] sm:$0xff]
  %vm79 = vcmask 261120
  %v81 = vsel %vm79, 0.0, 0
  %83 = vmatpush.msra.mxu0 0.0
  %84 = vmatpush.msra.mxu0 0.0
  %85 = vmatpush.msra.mxu0 0.0
  %86 = vmatpush.msra.mxu0 0.0
  %87 = vmatpush.msra.mxu0 0.0
  %88 = vmatpush.msra.mxu0 0.0
  %89 = vmatpush.msra.mxu0 0.0
  %90 = vmatpush.msra.mxu0 0.0
  %91 = vmatpush.msra.mxu0 0.0
  %92 = vmatpush.msra.mxu0 0.0
  %93 = vmatpush.msra.mxu0 0.0
  %94 = vmatpush.msra.mxu0 0.0
  %95 = vmatpush.msra.mxu0 %v78
  %96 = vmatpush.msra.mxu0 %v77
  %97 = vmatpush.msra.mxu0 %v76
  %98 = vmatpush.msra.mxu0 %v75
  %99 = vmatmul.f32.gmra.mxu0 %v81
  %v100 = vpop.f32.mrf.mxu0
  %v101 = vadd.f32 0.0, %v100
  %102 = vdwg.mxu0
  %v103 = vadd.f32 %v70, %v101
  %v104 = vxor.u32 %v103, 2147483648
  %v105 = vmul.f32 %v104, 1.442695
  %v106 = vpow.pop %v105
  %v107 = vadd.f32 %v106, 1.0
  %v108 = vrcp.pop %v107
  %v109 = vmul.f32 %v107, %v108
  %v110 = vsub.f32 1.0, %v109
  %v111 = vmul.f32 %v108, %v110
  %v112 = vadd.f32 %v108, %v111
  %vm113 = vweird.f32 %v107
  %vm114 = vweird.f32 %v108
  %vm115 = vmor %vm113, %vm114
  %v116 = vsel %vm115, %v108, %v112
  %v117 = vand.u32 2147483647, %v107
  %vm118 = vcmp.eq.f32.partialorder %v117, 8.507059e+37
  %v119 = vand.u32 %v107, 2147483648
  %v120 = vor.u32 1.1754944e-38, %v119
  %v121 = vsel %vm118, %v120, %v116
  %v122 = vmul.f32 1.0, %v121
  %v123 = vtanh.pop %v103
  %v124 = vmul.f32 %v122, 0.0
  %126 = vrot.lane.b32.xlu0 %v123, 64
  %v127 = vpop.permute.xlu0 %126
  %v129 = vmul.f32 %v122, %v127
  %131 = vrot.lane.b32.xlu0 %v129, 32
  %v132 = vpop.permute.xlu0 %131
  %v134 = vadd.f32 %v124, %v132
  %v135 = vtanh.pop %v134
  %137 = vrot.lane.b32.xlu0 %v135, 64
  %v138 = vpop.permute.xlu0 %137
  %v140 = vmul.f32 %v122, %v138
  %142 = vrot.lane.b32.xlu0 %v140, 32
  %v143 = vpop.permute.xlu0 %142
  %v144 = vsel %vm79, %v143, 0
  %146 = vmatpush.msra.mxu0 0.0
  %147 = vmatpush.msra.mxu0 0.0
  %148 = vmatpush.msra.mxu0 0.0
  %149 = vmatpush.msra.mxu0 0.0
  %150 = vmatpush.msra.mxu0 0.0
  %151 = vmatpush.msra.mxu0 0.0
  %152 = vmatpush.msra.mxu0 0.0
  %153 = vmatpush.msra.mxu0 0.0
  %154 = vmatpush.msra.mxu0 0.0
  %155 = vmatpush.msra.mxu0 0.0
  %156 = vmatpush.msra.mxu0 0.0
  %157 = vmatpush.msra.mxu0 0.0
  %158 = vmatpush.msra.mxu0 %v78
  %159 = vmatpush.msra.mxu0 %v77
  %160 = vmatpush.msra.mxu0 %v76
  %161 = vmatpush.msra.mxu0 %v75
  %162 = vmatmul.f32.gmra.mxu0 %v144
  %v163 = vpop.f32.mrf.mxu0
  %v164 = vadd.f32 0.0, %v163
  %165 = vdwg.mxu0
  %v167 = vrot.slane %v164, 6
  %v169 = vadd.f32 %v70, %v167
  %v170 = vxor.u32 %v169, 2147483648
  %v171 = vmul.f32 %v170, 1.442695
  %v172 = vpow.pop %v171
  %v173 = vadd.f32 %v172, 1.0
  %v174 = vrcp.pop %v173
  %v175 = vmul.f32 %v173, %v174
  %v176 = vsub.f32 1.0, %v175
  %v177 = vmul.f32 %v174, %v176
  %v178 = vadd.f32 %v174, %v177
  %vm179 = vweird.f32 %v173
  %vm180 = vweird.f32 %v174
  %vm181 = vmor %vm179, %vm180
  %v182 = vsel %vm181, %v174, %v178
  %v183 = vand.u32 2147483647, %v173
  %vm184 = vcmp.eq.f32.partialorder %v183, 8.507059e+37
  %v185 = vand.u32 %v173, 2147483648
  %v186 = vor.u32 1.1754944e-38, %v185
  %v187 = vsel %vm184, %v186, %v182
  %v188 = vmul.f32 1.0, %v187
  %v189 = vtanh.pop %v169
  %v191 = vrot.slane %v134, 6
  %v193 = vmul.f32 %v188, %v191
  %195 = vrot.lane.b32.xlu0 %v189, 64
  %v196 = vpop.permute.xlu0 %195
  %v198 = vmul.f32 %v188, %v196
  %200 = vrot.lane.b32.xlu0 %v198, 32
  %v201 = vpop.permute.xlu0 %200
  %v203 = vadd.f32 %v193, %v201
  %v204 = vtanh.pop %v203
  %206 = vrot.lane.b32.xlu0 %v204, 64
  %v207 = vpop.permute.xlu0 %206
  %v209 = vmul.f32 %v188, %v207
  %v211 = vrot.slane %v209, 2
  %212 = vrot.lane.b32.xlu0 %v211, 32
  %v213 = vpop.permute.xlu0 %212
  %v214 = vsel %vm79, %v213, 0
  %216 = vmatpush.msra.mxu0 0.0
  %217 = vmatpush.msra.mxu0 0.0
  %218 = vmatpush.msra.mxu0 0.0
  %219 = vmatpush.msra.mxu0 0.0
  %220 = vmatpush.msra.mxu0 0.0
  %221 = vmatpush.msra.mxu0 0.0
  %222 = vmatpush.msra.mxu0 0.0
  %223 = vmatpush.msra.mxu0 0.0
  %224 = vmatpush.msra.mxu0 0.0
  %225 = vmatpush.msra.mxu0 0.0
  %226 = vmatpush.msra.mxu0 0.0
  %227 = vmatpush.msra.mxu0 0.0
  %228 = vmatpush.msra.mxu0 %v78
  %229 = vmatpush.msra.mxu0 %v77
  %230 = vmatpush.msra.mxu0 %v76
  %231 = vmatpush.msra.mxu0 %v75
  %232 = vmatmul.f32.gmra.mxu0 %v214
  %v233 = vpop.f32.mrf.mxu0
  %v234 = vadd.f32 0.0, %v233
  %235 = vdwg.mxu0
  %v237 = vrot.slane %v234, 4
  %v239 = vadd.f32 %v70, %v237
  %v240 = vxor.u32 %v239, 2147483648
  %v241 = vmul.f32 %v240, 1.442695
  %v242 = vpow.pop %v241
  %v243 = vadd.f32 %v242, 1.0
  %v244 = vrcp.pop %v243
  %v245 = vmul.f32 %v243, %v244
  %v246 = vsub.f32 1.0, %v245
  %v247 = vmul.f32 %v244, %v246
  %v248 = vadd.f32 %v244, %v247
  %vm249 = vweird.f32 %v243
  %vm250 = vweird.f32 %v244
  %vm251 = vmor %vm249, %vm250
  %v252 = vsel %vm251, %v244, %v248
  %v253 = vand.u32 2147483647, %v243
  %vm254 = vcmp.eq.f32.partialorder %v253, 8.507059e+37
  %v255 = vand.u32 %v243, 2147483648
  %v256 = vor.u32 1.1754944e-38, %v255
  %v257 = vsel %vm254, %v256, %v252
  %v258 = vmul.f32 1.0, %v257
  %v259 = vtanh.pop %v239
  %v261 = vrot.slane %v203, 6
  %v263 = vmul.f32 %v258, %v261
  %265 = vrot.lane.b32.xlu0 %v259, 64
  %v266 = vpop.permute.xlu0 %265
  %v268 = vmul.f32 %v258, %v266
  %270 = vrot.lane.b32.xlu0 %v268, 32
  %v271 = vpop.permute.xlu0 %270
  %v273 = vadd.f32 %v263, %v271
  %v274 = vtanh.pop %v273
  %276 = vrot.lane.b32.xlu0 %v274, 64
  %v277 = vpop.permute.xlu0 %276
  %v279 = vmul.f32 %v258, %v277
  %v281 = vrot.slane %v279, 4
  %282 = vrot.lane.b32.xlu0 %v281, 32
  %v283 = vpop.permute.xlu0 %282
  %v284 = vsel %vm79, %v283, 0
  %286 = vmatpush.msra.mxu0 0.0
  %287 = vmatpush.msra.mxu0 0.0
  %288 = vmatpush.msra.mxu0 0.0
  %289 = vmatpush.msra.mxu0 0.0
  %290 = vmatpush.msra.mxu0 0.0
  %291 = vmatpush.msra.mxu0 0.0
  %292 = vmatpush.msra.mxu0 0.0
  %293 = vmatpush.msra.mxu0 0.0
  %294 = vmatpush.msra.mxu0 0.0
  %295 = vmatpush.msra.mxu0 0.0
  %296 = vmatpush.msra.mxu0 0.0
  %297 = vmatpush.msra.mxu0 0.0
  %298 = vmatpush.msra.mxu0 %v78
  %299 = vmatpush.msra.mxu0 %v77
  %300 = vmatpush.msra.mxu0 %v76
  %301 = vmatpush.msra.mxu0 %v75
  %302 = vmatmul.f32.gmra.mxu0 %v284
  %v303 = vpop.f32.mrf.mxu0
  %v304 = vadd.f32 0.0, %v303
  %305 = vdwg.mxu0
  %v307 = vrot.slane %v304, 2
  %v309 = vadd.f32 %v70, %v307
  %v310 = vxor.u32 %v309, 2147483648
  %v311 = vmul.f32 %v310, 1.442695
  %v312 = vpow.pop %v311
  %v313 = vadd.f32 %v312, 1.0
  %v314 = vrcp.pop %v313
  %v315 = vmul.f32 %v313, %v314
  %v316 = vsub.f32 1.0, %v315
  %v317 = vmul.f32 %v314, %v316
  %v318 = vadd.f32 %v314, %v317
  %vm319 = vweird.f32 %v313
  %vm320 = vweird.f32 %v314
  %vm321 = vmor %vm319, %vm320
  %v322 = vsel %vm321, %v314, %v318
  %v323 = vand.u32 2147483647, %v313
  %vm324 = vcmp.eq.f32.partialorder %v323, 8.507059e+37
  %v325 = vand.u32 %v313, 2147483648
  %v326 = vor.u32 1.1754944e-38, %v325
  %v327 = vsel %vm324, %v326, %v322
  %v328 = vmul.f32 1.0, %v327
  %v329 = vtanh.pop %v309
  %v331 = vrot.slane %v273, 6
  %v333 = vmul.f32 %v328, %v331
  %335 = vrot.lane.b32.xlu0 %v329, 64
  %v336 = vpop.permute.xlu0 %335
  %v338 = vmul.f32 %v328, %v336
  %340 = vrot.lane.b32.xlu0 %v338, 32
  %v341 = vpop.permute.xlu0 %340
  %v343 = vadd.f32 %v333, %v341
  %v344 = vtanh.pop %v343
  %346 = vrot.lane.b32.xlu0 %v344, 64
  %v347 = vpop.permute.xlu0 %346
  %v349 = vmul.f32 %v328, %v347
  %v351 = vrot.slane %v349, 6
  %352 = vrot.lane.b32.xlu0 %v351, 32
  %v353 = vpop.permute.xlu0 %352
  %v354 = vsel %vm79, %v353, 0
  %356 = vmatpush.msra.mxu0 0.0
  %357 = vmatpush.msra.mxu0 0.0
  %358 = vmatpush.msra.mxu0 0.0
  %359 = vmatpush.msra.mxu0 0.0
  %360 = vmatpush.msra.mxu0 0.0
  %361 = vmatpush.msra.mxu0 0.0
  %362 = vmatpush.msra.mxu0 0.0
  %363 = vmatpush.msra.mxu0 0.0
  %364 = vmatpush.msra.mxu0 0.0
  %365 = vmatpush.msra.mxu0 0.0
  %366 = vmatpush.msra.mxu0 0.0
  %367 = vmatpush.msra.mxu0 0.0
  %368 = vmatpush.msra.mxu0 %v78
  %369 = vmatpush.msra.mxu0 %v77
  %370 = vmatpush.msra.mxu0 %v76
  %371 = vmatpush.msra.mxu0 %v75
  %372 = vmatmul.f32.gmra.mxu0 %v354
  %v373 = vpop.f32.mrf.mxu0
  %v374 = vadd.f32 0.0, %v373
  %375 = vdwg.mxu0
  %v376 = vadd.f32 %v73, %v374
  %v377 = vxor.u32 %v376, 2147483648
  %v378 = vmul.f32 %v377, 1.442695
  %v379 = vpow.pop %v378
  %v380 = vadd.f32 %v379, 1.0
  %v381 = vrcp.pop %v380
  %v382 = vmul.f32 %v380, %v381
  %v383 = vsub.f32 1.0, %v382
  %v384 = vmul.f32 %v381, %v383
  %v385 = vadd.f32 %v381, %v384
  %vm386 = vweird.f32 %v380
  %vm387 = vweird.f32 %v381
  %vm388 = vmor %vm386, %vm387
  %v389 = vsel %vm388, %v381, %v385
  %v390 = vand.u32 2147483647, %v380
  %vm391 = vcmp.eq.f32.partialorder %v390, 8.507059e+37
  %v392 = vand.u32 %v380, 2147483648
  %v393 = vor.u32 1.1754944e-38, %v392
  %v394 = vsel %vm391, %v393, %v389
  %v395 = vmul.f32 1.0, %v394
  %v396 = vtanh.pop %v376
  %v398 = vrot.slane %v343, 6
  %v400 = vmul.f32 %v395, %v398
  %402 = vrot.lane.b32.xlu0 %v396, 64
  %v403 = vpop.permute.xlu0 %402
  %v405 = vmul.f32 %v395, %v403
  %407 = vrot.lane.b32.xlu0 %v405, 32
  %v408 = vpop.permute.xlu0 %407
  %v410 = vadd.f32 %v400, %v408
  %v411 = vtanh.pop %v410
  %413 = vrot.lane.b32.xlu0 %v411, 64
  %v414 = vpop.permute.xlu0 %413
  %v416 = vmul.f32 %v395, %v414
  %418 = vrot.lane.b32.xlu0 %v416, 32
  %v419 = vpop.permute.xlu0 %418
  %v420 = vsel %vm79, %v419, 0
  %422 = vmatpush.msra.mxu0 0.0
  %423 = vmatpush.msra.mxu0 0.0
  %424 = vmatpush.msra.mxu0 0.0
  %425 = vmatpush.msra.mxu0 0.0
  %426 = vmatpush.msra.mxu0 0.0
  %427 = vmatpush.msra.mxu0 0.0
  %428 = vmatpush.msra.mxu0 0.0
  %429 = vmatpush.msra.mxu0 0.0
  %430 = vmatpush.msra.mxu0 0.0
  %431 = vmatpush.msra.mxu0 0.0
  %432 = vmatpush.msra.mxu0 0.0
  %433 = vmatpush.msra.mxu0 0.0
  %434 = vmatpush.msra.mxu0 %v78
  %435 = vmatpush.msra.mxu0 %v77
  %436 = vmatpush.msra.mxu0 %v76
  %437 = vmatpush.msra.mxu0 %v75
  %438 = vmatmul.f32.gmra.mxu0 %v420
  %v439 = vpop.f32.mrf.mxu0
  %v440 = vadd.f32 0.0, %v439
  %441 = vdwg.mxu0
  %v443 = vrot.slane %v440, 6
  %v445 = vadd.f32 %v73, %v443
  %v446 = vxor.u32 %v445, 2147483648
  %v447 = vmul.f32 %v446, 1.442695
  %v448 = vpow.pop %v447
  %v449 = vadd.f32 %v448, 1.0
  %v450 = vrcp.pop %v449
  %v451 = vmul.f32 %v449, %v450
  %v452 = vsub.f32 1.0, %v451
  %v453 = vmul.f32 %v450, %v452
  %v454 = vadd.f32 %v450, %v453
  %vm455 = vweird.f32 %v449
  %vm456 = vweird.f32 %v450
  %vm457 = vmor %vm455, %vm456
  %v458 = vsel %vm457, %v450, %v454
  %v459 = vand.u32 2147483647, %v449
  %vm460 = vcmp.eq.f32.partialorder %v459, 8.507059e+37
  %v461 = vand.u32 %v449, 2147483648
  %v462 = vor.u32 1.1754944e-38, %v461
  %v463 = vsel %vm460, %v462, %v458
  %v464 = vmul.f32 1.0, %v463
  %v465 = vtanh.pop %v445
  %v467 = vrot.slane %v410, 6
  %v469 = vmul.f32 %v464, %v467
  %471 = vrot.lane.b32.xlu0 %v465, 64
  %v472 = vpop.permute.xlu0 %471
  %v474 = vmul.f32 %v464, %v472
  %476 = vrot.lane.b32.xlu0 %v474, 32
  %v477 = vpop.permute.xlu0 %476
  %v479 = vadd.f32 %v469, %v477
  %v480 = vtanh.pop %v479
  %482 = vrot.lane.b32.xlu0 %v480, 64
  %v483 = vpop.permute.xlu0 %482
  %v485 = vmul.f32 %v464, %v483
  %v487 = vrot.slane %v485, 2
  %488 = vrot.lane.b32.xlu0 %v487, 32
  %v489 = vpop.permute.xlu0 %488
  %v490 = vsel %vm79, %v489, 0
  %492 = vmatpush.msra.mxu0 0.0
  %493 = vmatpush.msra.mxu0 0.0
  %494 = vmatpush.msra.mxu0 0.0
  %495 = vmatpush.msra.mxu0 0.0
  %496 = vmatpush.msra.mxu0 0.0
  %497 = vmatpush.msra.mxu0 0.0
  %498 = vmatpush.msra.mxu0 0.0
  %499 = vmatpush.msra.mxu0 0.0
  %500 = vmatpush.msra.mxu0 0.0
  %501 = vmatpush.msra.mxu0 0.0
  %502 = vmatpush.msra.mxu0 0.0
  %503 = vmatpush.msra.mxu0 0.0
  %504 = vmatpush.msra.mxu0 %v78
  %505 = vmatpush.msra.mxu0 %v77
  %506 = vmatpush.msra.mxu0 %v76
  %507 = vmatpush.msra.mxu0 %v75
  %508 = vmatmul.f32.gmra.mxu0 %v490
  %v509 = vpop.f32.mrf.mxu0
  %v510 = vadd.f32 0.0, %v509
  %511 = vdwg.mxu0
  %v513 = vrot.slane %v510, 4
  %v515 = vadd.f32 %v73, %v513
  %v516 = vxor.u32 %v515, 2147483648
  %v517 = vmul.f32 %v516, 1.442695
  %v518 = vpow.pop %v517
  %v519 = vadd.f32 %v518, 1.0
  %v520 = vrcp.pop %v519
  %v521 = vmul.f32 %v519, %v520
  %v522 = vsub.f32 1.0, %v521
  %v523 = vmul.f32 %v520, %v522
  %v524 = vadd.f32 %v520, %v523
  %vm525 = vweird.f32 %v519
  %vm526 = vweird.f32 %v520
  %vm527 = vmor %vm525, %vm526
  %v528 = vsel %vm527, %v520, %v524
  %v529 = vand.u32 2147483647, %v519
  %vm530 = vcmp.eq.f32.partialorder %v529, 8.507059e+37
  %v531 = vand.u32 %v519, 2147483648
  %v532 = vor.u32 1.1754944e-38, %v531
  %v533 = vsel %vm530, %v532, %v528
  %v534 = vmul.f32 1.0, %v533
  %v535 = vtanh.pop %v515
  %v537 = vrot.slane %v479, 6
  %v539 = vmul.f32 %v534, %v537
  %541 = vrot.lane.b32.xlu0 %v535, 64
  %v542 = vpop.permute.xlu0 %541
  %v544 = vmul.f32 %v534, %v542
  %546 = vrot.lane.b32.xlu0 %v544, 32
  %v547 = vpop.permute.xlu0 %546
  %v549 = vadd.f32 %v539, %v547
  %v550 = vtanh.pop %v549
  %552 = vrot.lane.b32.xlu0 %v550, 64
  %v553 = vpop.permute.xlu0 %552
  %v555 = vmul.f32 %v534, %v553
  %v557 = vrot.slane %v555, 4
  %558 = vrot.lane.b32.xlu0 %v557, 32
  %v559 = vpop.permute.xlu0 %558
  %v560 = vsel %vm79, %v559, 0
  %562 = vmatpush.msra.mxu0 0.0
  %563 = vmatpush.msra.mxu0 0.0
  %564 = vmatpush.msra.mxu0 0.0
  %565 = vmatpush.msra.mxu0 0.0
  %566 = vmatpush.msra.mxu0 0.0
  %567 = vmatpush.msra.mxu0 0.0
  %568 = vmatpush.msra.mxu0 0.0
  %569 = vmatpush.msra.mxu0 0.0
  %570 = vmatpush.msra.mxu0 0.0
  %571 = vmatpush.msra.mxu0 0.0
  %572 = vmatpush.msra.mxu0 0.0
  %573 = vmatpush.msra.mxu0 0.0
  %574 = vmatpush.msra.mxu0 %v78
  %575 = vmatpush.msra.mxu0 %v77
  %576 = vmatpush.msra.mxu0 %v76
  %577 = vmatpush.msra.mxu0 %v75
  %578 = vmatmul.f32.gmra.mxu0 %v560
  %v579 = vpop.f32.mrf.mxu0
  %v580 = vadd.f32 0.0, %v579
  %581 = vdwg.mxu0
  %v583 = vrot.slane %v580, 2
  %v585 = vadd.f32 %v73, %v583
  %v586 = vxor.u32 %v585, 2147483648
  %v587 = vmul.f32 %v586, 1.442695
  %v588 = vpow.pop %v587
  %v589 = vadd.f32 %v588, 1.0
  %v590 = vrcp.pop %v589
  %v591 = vmul.f32 %v589, %v590
  %v592 = vsub.f32 1.0, %v591
  %v593 = vmul.f32 %v590, %v592
  %v594 = vadd.f32 %v590, %v593
  %vm595 = vweird.f32 %v589
  %vm596 = vweird.f32 %v590
  %vm597 = vmor %vm595, %vm596
  %v598 = vsel %vm597, %v590, %v594
  %v599 = vand.u32 2147483647, %v589
  %vm600 = vcmp.eq.f32.partialorder %v599, 8.507059e+37
  %v601 = vand.u32 %v589, 2147483648
  %v602 = vor.u32 1.1754944e-38, %v601
  %v603 = vsel %vm600, %v602, %v598
  %v604 = vmul.f32 1.0, %v603
  %v605 = vtanh.pop %v585
  %v607 = vrot.slane %v549, 6
  %v609 = vmul.f32 %v604, %v607
  %611 = vrot.lane.b32.xlu0 %v605, 64
  %v612 = vpop.permute.xlu0 %611
  %v614 = vmul.f32 %v604, %v612
  %616 = vrot.lane.b32.xlu0 %v614, 32
  %v617 = vpop.permute.xlu0 %616
  %v619 = vadd.f32 %v609, %v617
  %v620 = vtanh.pop %v619
  %622 = vrot.lane.b32.xlu0 %v620, 64
  %v623 = vpop.permute.xlu0 %622
  %v625 = vmul.f32 %v604, %v623
  %v626 = vld [vmem:[%s0 + $0xe] sm:$0x3]
  %v627 = vld [vmem:[%s4] sm:$0xff]
  %v628 = vld [vmem:[%s5] sm:$0xff]
  %v629 = vld [vmem:[%s5 + $0x8] sm:$0xff]
  %v630 = vld [vmem:[%s5 + $0x10] sm:$0xff]
  %v631 = vld [vmem:[%s5 + $0x18] sm:$0xff]
  %v633 = vrot.slane %v625, 6
  %634 = vrot.lane.b32.xlu0 %v633, 32
  %v635 = vpop.permute.xlu0 %634
  %v636 = vsel %vm79, %v635, 0
  %638 = vmatpush.msra.mxu0 0.0
  %639 = vmatpush.msra.mxu0 0.0
  %640 = vmatpush.msra.mxu0 0.0
  %641 = vmatpush.msra.mxu0 0.0
  %642 = vmatpush.msra.mxu0 0.0
  %643 = vmatpush.msra.mxu0 0.0
  %644 = vmatpush.msra.mxu0 0.0
  %645 = vmatpush.msra.mxu0 0.0
  %646 = vmatpush.msra.mxu0 0.0
  %647 = vmatpush.msra.mxu0 0.0
  %648 = vmatpush.msra.mxu0 0.0
  %649 = vmatpush.msra.mxu0 0.0
  %650 = vmatpush.msra.mxu0 %v631
  %651 = vmatpush.msra.mxu0 %v630
  %652 = vmatpush.msra.mxu0 %v629
  %653 = vmatpush.msra.mxu0 %v628
  %654 = vmatmul.f32.gmra.mxu0 %v636
  %v655 = vpop.f32.mrf.mxu0
  %v656 = vadd.f32 0.0, %v655
  %657 = vdwg.mxu0
  %v659 = vsel %vm45, %v626, 0
  %661 = vmatpush.msra.mxu0 0.0
  %662 = vmatpush.msra.mxu0 0.0
  %663 = vmatpush.msra.mxu0 0.0
  %664 = vmatpush.msra.mxu0 0.0
  %665 = vmatpush.msra.mxu0 0.0
  %666 = vmatpush.msra.mxu0 0.0
  %667 = vmatpush.msra.mxu0 0.0
  %668 = vmatpush.msra.mxu0 0.0
  %669 = vmatpush.msra.mxu0 0.0
  %670 = vmatpush.msra.mxu0 0.0
  %671 = vmatpush.msra.mxu0 0.0
  %672 = vmatpush.msra.mxu0 0.0
  %673 = vmatpush.msra.mxu0 0.0
  %674 = vmatpush.msra.mxu0 0.0
  %675 = vmatpush.msra.mxu0 0.0
  %676 = vmatpush.msra.mxu0 %v627
  %677 = vmatmul.f32.gmra.mxu0 %v659
  %v678 = vpop.f32.mrf.mxu0
  %v679 = vadd.f32 %v656, %v678
  %680 = vdwg.mxu0
  %v681 = vld [vmem:[%s6] sm:$0x1]
  %v683 = vperm.slane %v681, 0
  %v685 = vadd.f32 %v679, %v683
  %v686 = vxor.u32 %v685, 2147483648
  %v687 = vmul.f32 %v686, 1.442695
  %v688 = vpow.pop %v687
  %v689 = vadd.f32 %v688, 1.0
  %v690 = vrcp.pop %v689
  %v691 = vmul.f32 %v689, %v690
  %v692 = vsub.f32 1.0, %v691
  %v693 = vmul.f32 %v690, %v692
  %v694 = vadd.f32 %v690, %v693
  %vm695 = vweird.f32 %v689
  %vm696 = vweird.f32 %v690
  %vm697 = vmor %vm695, %vm696
  %v698 = vsel %vm697, %v690, %v694
  %v699 = vand.u32 2147483647, %v689
  %vm700 = vcmp.eq.f32.partialorder %v699, 8.507059e+37
  %v701 = vand.u32 %v689, 2147483648
  %v702 = vor.u32 1.1754944e-38, %v701
  %v703 = vsel %vm700, %v702, %v698
  %v704 = vmul.f32 1.0, %v703
  %v705 = vtanh.pop %v685
  %v707 = vrot.slane %v619, 6
  %v709 = vmul.f32 %v704, %v707
  %711 = vrot.lane.b32.xlu0 %v705, 64
  %v712 = vpop.permute.xlu0 %711
  %v714 = vmul.f32 %v704, %v712
  %716 = vrot.lane.b32.xlu0 %v714, 32
  %v717 = vpop.permute.xlu0 %716
  %v719 = vadd.f32 %v709, %v717
  %v720 = vtanh.pop %v719
  %722 = vrot.lane.b32.xlu0 %v720, 64
  %v723 = vpop.permute.xlu0 %722
  %v725 = vmul.f32 %v704, %v723
  %v726 = vld [vmem:[%s9] sm:$0xff]
  %v727 = vld [vmem:[%s9 + $0x8] sm:$0xff]
  %v728 = vld [vmem:[%s9 + $0x10] sm:$0xff]
  %v729 = vld [vmem:[%s9 + $0x18] sm:$0xff]
  %v730 = vld [vmem:[%s10] sm:$0x1]
  %v732 = vperm.slane %v730, 0
  %v734 = vld [vmem:[%s7] sm:$0xff]
  %v735 = vld [vmem:[%s7 + $0x8] sm:$0xff]
  %v736 = vld [vmem:[%s7 + $0x10] sm:$0xff]
  %v737 = vld [vmem:[%s7 + $0x18] sm:$0xff]
  %v738 = vld [vmem:[%s8] sm:$0x1]
  %v740 = vperm.slane %v738, 0
  %743 = vrot.lane.b32.xlu0 %v725, 32
  %v744 = vpop.permute.xlu0 %743
  %v745 = vsel %vm79, %v744, 0
  %747 = vmatpush.msra.mxu0 0.0
  %748 = vmatpush.msra.mxu0 0.0
  %749 = vmatpush.msra.mxu0 0.0
  %750 = vmatpush.msra.mxu0 0.0
  %751 = vmatpush.msra.mxu0 0.0
  %752 = vmatpush.msra.mxu0 0.0
  %753 = vmatpush.msra.mxu0 0.0
  %754 = vmatpush.msra.mxu0 0.0
  %755 = vmatpush.msra.mxu0 0.0
  %756 = vmatpush.msra.mxu0 0.0
  %757 = vmatpush.msra.mxu0 0.0
  %758 = vmatpush.msra.mxu0 0.0
  %759 = vmatpush.msra.mxu0 %v729
  %760 = vmatpush.msra.mxu0 %v728
  %761 = vmatpush.msra.mxu0 %v727
  %762 = vmatpush.msra.mxu0 %v726
  %763 = vmatmul.f32.gmra.mxu0 %v745
  %v764 = vpop.f32.mrf.mxu0
  %v765 = vadd.f32 %v732, %v764
  %766 = vdwg.mxu0
  %767 = vst [vmem:[%s11] sm:$0x3] %v765
  %768 = vmatpush.msra.mxu0 0.0
  %769 = vmatpush.msra.mxu0 0.0
  %770 = vmatpush.msra.mxu0 0.0
  %771 = vmatpush.msra.mxu0 0.0
  %772 = vmatpush.msra.mxu0 0.0
  %773 = vmatpush.msra.mxu0 0.0
  %774 = vmatpush.msra.mxu0 0.0
  %775 = vmatpush.msra.mxu0 0.0
  %776 = vmatpush.msra.mxu0 0.0
  %777 = vmatpush.msra.mxu0 0.0
  %778 = vmatpush.msra.mxu0 0.0
  %779 = vmatpush.msra.mxu0 0.0
  %780 = vmatpush.msra.mxu0 %v737
  %781 = vmatpush.msra.mxu0 %v736
  %782 = vmatpush.msra.mxu0 %v735
  %783 = vmatpush.msra.mxu0 %v734
  %784 = vmatmul.f32.gmra.mxu0 %v745
  %v785 = vpop.f32.mrf.mxu0
  %v786 = vadd.f32 %v740, %v785
  %787 = vdwg.mxu0
  %v788 = vxor.u32 %v786, 2147483648
  %v789 = vmul.f32 %v788, 1.442695
  %v790 = vpow.pop %v789
  %v791 = vadd.f32 %v790, 1.0
  %v792 = vrcp.pop %v791
  %v793 = vmul.f32 %v791, %v792
  %v794 = vsub.f32 1.0, %v793
  %v795 = vmul.f32 %v792, %v794
  %v796 = vadd.f32 %v792, %v795
  %vm797 = vweird.f32 %v791
  %vm798 = vweird.f32 %v792
  %vm799 = vmor %vm797, %vm798
  %v800 = vsel %vm799, %v792, %v796
  %v801 = vand.u32 2147483647, %v791
  %vm802 = vcmp.eq.f32.partialorder %v801, 8.507059e+37
  %v803 = vand.u32 %v791, 2147483648
  %v804 = vor.u32 1.1754944e-38, %v803
  %v805 = vsel %vm802, %v804, %v800
  %v806 = vmul.f32 1.0, %v805
  %v807 = vtanh.pop %v786
  %v808 = vmul.f32 %v806, %v719
  %810 = vrot.lane.b32.xlu0 %v807, 64
  %v811 = vpop.permute.xlu0 %810
  %v813 = vmul.f32 %v806, %v811
  %815 = vrot.lane.b32.xlu0 %v813, 32
  %v816 = vpop.permute.xlu0 %815
  %v818 = vadd.f32 %v808, %v816
  %v819 = vtanh.pop %v818
  %821 = vrot.lane.b32.xlu0 %v819, 64
  %v822 = vpop.permute.xlu0 %821
  %v824 = vmul.f32 %v806, %v822
  %826 = vrot.lane.b32.xlu0 %v824, 32
  %v827 = vpop.permute.xlu0 %826
  %v828 = vsel %vm79, %v827, 0
  %830 = vmatpush.msra.mxu0 0.0
  %831 = vmatpush.msra.mxu0 0.0
  %832 = vmatpush.msra.mxu0 0.0
  %833 = vmatpush.msra.mxu0 0.0
  %834 = vmatpush.msra.mxu0 0.0
  %835 = vmatpush.msra.mxu0 0.0
  %836 = vmatpush.msra.mxu0 0.0
  %837 = vmatpush.msra.mxu0 0.0
  %838 = vmatpush.msra.mxu0 0.0
  %839 = vmatpush.msra.mxu0 0.0
  %840 = vmatpush.msra.mxu0 0.0
  %841 = vmatpush.msra.mxu0 0.0
  %842 = vmatpush.msra.mxu0 %v729
  %843 = vmatpush.msra.mxu0 %v728
  %844 = vmatpush.msra.mxu0 %v727
  %845 = vmatpush.msra.mxu0 %v726
  %846 = vmatmul.f32.gmra.mxu0 %v828
  %v847 = vpop.f32.mrf.mxu0
  %v848 = vadd.f32 %v732, %v847
  %849 = vdwg.mxu0
  %850 = vst [vmem:[%s11 + $0x2] sm:$0x3] %v848
  %851 = vmatpush.msra.mxu0 0.0
  %852 = vmatpush.msra.mxu0 0.0
  %853 = vmatpush.msra.mxu0 0.0
  %854 = vmatpush.msra.mxu0 0.0
  %855 = vmatpush.msra.mxu0 0.0
  %856 = vmatpush.msra.mxu0 0.0
  %857 = vmatpush.msra.mxu0 0.0
  %858 = vmatpush.msra.mxu0 0.0
  %859 = vmatpush.msra.mxu0 0.0
  %860 = vmatpush.msra.mxu0 0.0
  %861 = vmatpush.msra.mxu0 0.0
  %862 = vmatpush.msra.mxu0 0.0
  %863 = vmatpush.msra.mxu0 %v737
  %864 = vmatpush.msra.mxu0 %v736
  %865 = vmatpush.msra.mxu0 %v735
  %866 = vmatpush.msra.mxu0 %v734
  %867 = vmatmul.f32.gmra.mxu0 %v828
  %v868 = vpop.f32.mrf.mxu0
  %v869 = vadd.f32 %v740, %v868
  %870 = vdwg.mxu0
  %v871 = vxor.u32 %v869, 2147483648
  %v872 = vmul.f32 %v871, 1.442695
  %v873 = vpow.pop %v872
  %v874 = vadd.f32 %v873, 1.0
  %v875 = vrcp.pop %v874
  %v876 = vmul.f32 %v874, %v875
  %v877 = vsub.f32 1.0, %v876
  %v878 = vmul.f32 %v875, %v877
  %v879 = vadd.f32 %v875, %v878
  %vm880 = vweird.f32 %v874
  %vm881 = vweird.f32 %v875
  %vm882 = vmor %vm880, %vm881
  %v883 = vsel %vm882, %v875, %v879
  %v884 = vand.u32 2147483647, %v874
  %vm885 = vcmp.eq.f32.partialorder %v884, 8.507059e+37
  %v886 = vand.u32 %v874, 2147483648
  %v887 = vor.u32 1.1754944e-38, %v886
  %v888 = vsel %vm885, %v887, %v883
  %v889 = vmul.f32 1.0, %v888
  %v890 = vtanh.pop %v869
  %v891 = vmul.f32 %v889, %v818
  %893 = vrot.lane.b32.xlu0 %v890, 64
  %v894 = vpop.permute.xlu0 %893
  %v896 = vmul.f32 %v889, %v894
  %898 = vrot.lane.b32.xlu0 %v896, 32
  %v899 = vpop.permute.xlu0 %898
  %v901 = vadd.f32 %v891, %v899
  %v902 = vtanh.pop %v901
  %904 = vrot.lane.b32.xlu0 %v902, 64
  %v905 = vpop.permute.xlu0 %904
  %v907 = vmul.f32 %v889, %v905
  %909 = vrot.lane.b32.xlu0 %v907, 32
  %v910 = vpop.permute.xlu0 %909
  %v911 = vsel %vm79, %v910, 0
  %913 = vmatpush.msra.mxu0 0.0
  %914 = vmatpush.msra.mxu0 0.0
  %915 = vmatpush.msra.mxu0 0.0
  %916 = vmatpush.msra.mxu0 0.0
  %917 = vmatpush.msra.mxu0 0.0
  %918 = vmatpush.msra.mxu0 0.0
  %919 = vmatpush.msra.mxu0 0.0
  %920 = vmatpush.msra.mxu0 0.0
  %921 = vmatpush.msra.mxu0 0.0
  %922 = vmatpush.msra.mxu0 0.0
  %923 = vmatpush.msra.mxu0 0.0
  %924 = vmatpush.msra.mxu0 0.0
  %925 = vmatpush.msra.mxu0 %v729
  %926 = vmatpush.msra.mxu0 %v728
  %927 = vmatpush.msra.mxu0 %v727
  %928 = vmatpush.msra.mxu0 %v726
  %929 = vmatmul.f32.gmra.mxu0 %v911
  %v930 = vpop.f32.mrf.mxu0
  %v931 = vadd.f32 %v732, %v930
  %932 = vdwg.mxu0
  %933 = vst [vmem:[%s11 + $0x4] sm:$0x3] %v931
  %934 = vmatpush.msra.mxu0 0.0
  %935 = vmatpush.msra.mxu0 0.0
  %936 = vmatpush.msra.mxu0 0.0
  %937 = vmatpush.msra.mxu0 0.0
  %938 = vmatpush.msra.mxu0 0.0
  %939 = vmatpush.msra.mxu0 0.0
  %940 = vmatpush.msra.mxu0 0.0
  %941 = vmatpush.msra.mxu0 0.0
  %942 = vmatpush.msra.mxu0 0.0
  %943 = vmatpush.msra.mxu0 0.0
  %944 = vmatpush.msra.mxu0 0.0
  %945 = vmatpush.msra.mxu0 0.0
  %946 = vmatpush.msra.mxu0 %v737
  %947 = vmatpush.msra.mxu0 %v736
  %948 = vmatpush.msra.mxu0 %v735
  %949 = vmatpush.msra.mxu0 %v734
  %950 = vmatmul.f32.gmra.mxu0 %v911
  %v951 = vpop.f32.mrf.mxu0
  %v952 = vadd.f32 %v740, %v951
  %953 = vdwg.mxu0
  %v954 = vxor.u32 %v952, 2147483648
  %v955 = vmul.f32 %v954, 1.442695
  %v956 = vpow.pop %v955
  %v957 = vadd.f32 %v956, 1.0
  %v958 = vrcp.pop %v957
  %v959 = vmul.f32 %v957, %v958
  %v960 = vsub.f32 1.0, %v959
  %v961 = vmul.f32 %v958, %v960
  %v962 = vadd.f32 %v958, %v961
  %vm963 = vweird.f32 %v957
  %vm964 = vweird.f32 %v958
  %vm965 = vmor %vm963, %vm964
  %v966 = vsel %vm965, %v958, %v962
  %v967 = vand.u32 2147483647, %v957
  %vm968 = vcmp.eq.f32.partialorder %v967, 8.507059e+37
  %v969 = vand.u32 %v957, 2147483648
  %v970 = vor.u32 1.1754944e-38, %v969
  %v971 = vsel %vm968, %v970, %v966
  %v972 = vmul.f32 1.0, %v971
  %v973 = vtanh.pop %v952
  %v974 = vmul.f32 %v972, %v901
  %976 = vrot.lane.b32.xlu0 %v973, 64
  %v977 = vpop.permute.xlu0 %976
  %v979 = vmul.f32 %v972, %v977
  %981 = vrot.lane.b32.xlu0 %v979, 32
  %v982 = vpop.permute.xlu0 %981
  %v984 = vadd.f32 %v974, %v982
  %v985 = vtanh.pop %v984
  %987 = vrot.lane.b32.xlu0 %v985, 64
  %v988 = vpop.permute.xlu0 %987
  %v990 = vmul.f32 %v972, %v988
  %992 = vrot.lane.b32.xlu0 %v990, 32
  %v993 = vpop.permute.xlu0 %992
  %v994 = vsel %vm79, %v993, 0
  %996 = vmatpush.msra.mxu0 0.0
  %997 = vmatpush.msra.mxu0 0.0
  %998 = vmatpush.msra.mxu0 0.0
  %999 = vmatpush.msra.mxu0 0.0
  %1000 = vmatpush.msra.mxu0 0.0
  %1001 = vmatpush.msra.mxu0 0.0
  %1002 = vmatpush.msra.mxu0 0.0
  %1003 = vmatpush.msra.mxu0 0.0
  %1004 = vmatpush.msra.mxu0 0.0
  %1005 = vmatpush.msra.mxu0 0.0
  %1006 = vmatpush.msra.mxu0 0.0
  %1007 = vmatpush.msra.mxu0 0.0
  %1008 = vmatpush.msra.mxu0 %v729
  %1009 = vmatpush.msra.mxu0 %v728
  %1010 = vmatpush.msra.mxu0 %v727
  %1011 = vmatpush.msra.mxu0 %v726
  %1012 = vmatmul.f32.gmra.mxu0 %v994
  %v1013 = vpop.f32.mrf.mxu0
  %v1014 = vadd.f32 %v732, %v1013
  %1015 = vdwg.mxu0
  %1016 = vst [vmem:[%s11 + $0x6] sm:$0x3] %v1014
  // Predicated region
  $region46: #{seq2seq_forward.1} parent=0 // pred_check
    _
  $region47: #{seq2seq_forward.1} parent=0 // pred_check_branch
    %1018 = sbr.rel (0) target = $region49
  $region48: #{seq2seq_forward.1} parent=0 // pred_region
    _
  $region49: #{seq2seq_forward.1} parent=0 // pred_fallthru
    _
  // Predicated region
  $region50: #{seq2seq_forward.1} parent=0 // pred_check
    _
  $region51: #{seq2seq_forward.1} parent=0 // pred_check_branch
    %1020 = sbr.rel (0) target = $region53
  $region52: #{seq2seq_forward.1} parent=0 // pred_region
    _
  $region53: #{seq2seq_forward.1} parent=0 // pred_fallthru
    _

</llo_original>
